<compile_context>
chip_gen: v7x
topology: tpu7x:2x2x1
jax: 0.10.0
libtpu: 0.0.40
codegen_flags: <defaults>
</compile_context>

<pallas_src>
import jax
import jax.numpy as jnp
from jax.experimental import pallas as pl
from jax.experimental.pallas import tpu as pltpu


# -------------------- problem sizes (small, synthetic) --------------------
N_AGENTS = 4
EMBED_DIM = 32
STATE_DIM = 32
HYPERNET_EMBED = 64
B, T = 2, 8                      # batch, time

H_FUSED = 2 * HYPERNET_EMBED             # 128 : fused first-layer width
W1_OUT = N_AGENTS * EMBED_DIM            # 128 : w1 output width (lane-dense)
W2_OUT = EMBED_DIM                       # 32  : w2 output width (un-padded)

SUBLANE = 8                              # f32 sublane granularity
MAX_ROW_TILE = 2048                      # rows per grid step at production bt
                                         # (~5.5 MiB/step incl. double-buffering;
                                         #  fits v5e's 16 MiB scoped default)


# ------------------------------ kernel ------------------------------------
def mixer_kernel(s_ref, wa_ref, ba_ref, wb1_ref, bb1_ref, wb2_ref, bb2_ref,
                 w1_ref, w2_ref):
    # Fused first layer: [h1 | h2] = relu(s @ [w1a | w2a] + [b1a | b2a])
    s = s_ref[...].astype(jnp.float32)                                   # (tile, 32)
    h = jnp.dot(s, wa_ref[...], preferred_element_type=jnp.float32)     # (tile, 128)
    h = jnp.maximum(h + ba_ref[...], 0.0)

    # Second layers + abs (weights are zero-padded on K only, so products are
    # exact; no padding columns are computed or stored):
    #   w1 = |h @ wb1 + b1b|   wb1: (128,128), rows [64:) are zero
    #   w2 = |h @ wb2 + b2b|   wb2: (128, 32), rows [:64) are zero
    y1 = jnp.dot(h, wb1_ref[...], preferred_element_type=jnp.float32)   # (tile, 128)
    w1_ref[...] = jnp.abs(y1 + bb1_ref[...]).astype(w1_ref.dtype)
    y2 = jnp.dot(h, wb2_ref[...], preferred_element_type=jnp.float32)   # (tile, 32)
    w2_ref[...] = jnp.abs(y2 + bb2_ref[...]).astype(w2_ref.dtype)


# ----------------------- one-time parameter fusion -------------------------
def fuse_mixer_params(params):
    """Fuse the two hypernets' weights once per parameter update (hoisted out
    of the per-call forward path)."""
    (w1a, b1a, w1b, b1b, w2a, b2a, w2b, b2b) = params
    f32 = jnp.float32
    wa = jnp.concatenate([w1a, w2a], axis=1).astype(f32)           # (32, 128)
    ba = jnp.concatenate([b1a, b2a], axis=1).astype(f32)           # (1, 128)
    wb1 = jnp.zeros((H_FUSED, W1_OUT), f32).at[:HYPERNET_EMBED, :].set(w1b)
    wb2 = jnp.zeros((H_FUSED, W2_OUT), f32).at[HYPERNET_EMBED:, :].set(w2b)
    bb1 = b1b.astype(f32)                                          # (1, 128)
    bb2 = b2b.astype(f32)                                          # (1, 32)
    return wa, ba, wb1, bb1, wb2, bb2


# ------------------------------ row tiling ----------------------------------
def _round_up(x, m):
    return ((x + m - 1) // m) * m


def _row_tiling(bt):
    """Return (padded_rows, row_tile, grid)."""
    pbt = _round_up(bt, SUBLANE)
    if pbt <= SUBLANE:
        return pbt, pbt, 1
    # At least 2 grid steps so v7x megacore can shard the "parallel" axis;
    # cap the tile so per-step VMEM stays small and steps amortize overhead.
    grid = max(2, pl.cdiv(pbt, MAX_ROW_TILE))
    tile = _round_up(pl.cdiv(pbt, grid), SUBLANE)
    grid = pl.cdiv(pbt, tile)
    return grid * tile, tile, grid


# ------------------------------ wrapper ------------------------------------
def mixer_forward(qvals, states, fused_params):
    """Returns (w1, w2) exactly as Mixer.forward does."""
    b, t, n_agents = qvals.shape
    assert n_agents == N_AGENTS
    bt = b * t
    states2 = states.reshape(bt, STATE_DIM).astype(jnp.float32)

    wa, ba, wb1, bb1, wb2, bb2 = fused_params

    rows, row_tile, grid_rows = _row_tiling(bt)
    if rows != bt:
        states2 = jnp.pad(states2, ((0, rows - bt), (0, 0)))

    cost = pl.CostEstimate(
        flops=2 * rows * H_FUSED * (STATE_DIM + W1_OUT + W2_OUT),
        transcendentals=0,
        bytes_accessed=4 * (rows * STATE_DIM
                            + STATE_DIM * H_FUSED + H_FUSED
                            + H_FUSED * (W1_OUT + W2_OUT) + W1_OUT + W2_OUT
                            + rows * (W1_OUT + W2_OUT)),
    )

    w1_flat, w2_flat = pl.pallas_call(
        mixer_kernel,
        out_shape=(jax.ShapeDtypeStruct((rows, W1_OUT), jnp.float32),
                   jax.ShapeDtypeStruct((rows, W2_OUT), jnp.float32)),
        grid_spec=pl.GridSpec(
            grid=(grid_rows,),
            in_specs=[
                pl.BlockSpec((row_tile, STATE_DIM), lambda i: (i, 0)),   # states
                pl.BlockSpec((STATE_DIM, H_FUSED), lambda i: (0, 0)),    # fused W_a
                pl.BlockSpec((1, H_FUSED), lambda i: (0, 0)),            # fused b_a
                pl.BlockSpec((H_FUSED, W1_OUT), lambda i: (0, 0)),       # W_b for w1
                pl.BlockSpec((1, W1_OUT), lambda i: (0, 0)),             # b_b for w1
                pl.BlockSpec((H_FUSED, W2_OUT), lambda i: (0, 0)),       # W_b for w2
                pl.BlockSpec((1, W2_OUT), lambda i: (0, 0)),             # b_b for w2
            ],
            out_specs=(pl.BlockSpec((row_tile, W1_OUT), lambda i: (i, 0)),
                       pl.BlockSpec((row_tile, W2_OUT), lambda i: (i, 0))),
        ),
        compiler_params=pltpu.CompilerParams(
            dimension_semantics=("parallel",)),   # 2x on v7x (grid >= 2 steps)
        cost_estimate=cost,
    )(states2, wa, ba, wb1, bb1, wb2, bb2)

    if rows != bt:
        w1_flat = w1_flat[:bt]
        w2_flat = w2_flat[:bt]

    w1 = w1_flat.reshape(bt, N_AGENTS, EMBED_DIM)   # free row-major view
    w2 = w2_flat.reshape(bt, EMBED_DIM, 1)          # free row-major view
    return w1, w2


# --------------------------- reference (pure JAX) ---------------------------
def mixer_ref(qvals, states, params):
    b, t, _ = qvals.shape
    s = states.reshape(b * t, STATE_DIM).astype(jnp.float32)
    (w1a, b1a, w1b, b1b, w2a, b2a, w2b, b2b) = params
    h1 = jnp.maximum(s @ w1a + b1a, 0.0)
    w1 = jnp.abs(h1 @ w1b + b1b).reshape(b * t, N_AGENTS, EMBED_DIM)
    h2 = jnp.maximum(s @ w2a + b2a, 0.0)
    w2 = jnp.abs(h2 @ w2b + b2b).reshape(b * t, EMBED_DIM, 1)
    return w1, w2


# ------------------------------ main ----------------------------------------
def make_params(key):
    ks = jax.random.split(key, 8)

    def lin(k, fan_in, fan_out):
        kw, kb = jax.random.split(k)
        bound = 1.0 / jnp.sqrt(fan_in)
        w = jax.random.uniform(kw, (fan_in, fan_out), jnp.float32, -bound, bound)
        b = jax.random.uniform(kb, (1, fan_out), jnp.float32, -bound, bound)
        return w, b

    w1a, b1a = lin(ks[0], STATE_DIM, HYPERNET_EMBED)
    w1b, b1b = lin(ks[1], HYPERNET_EMBED, N_AGENTS * EMBED_DIM)
    w2a, b2a = lin(ks[2], STATE_DIM, HYPERNET_EMBED)
    w2b, b2b = lin(ks[3], HYPERNET_EMBED, EMBED_DIM)
    return (w1a, b1a, w1b, b1b, w2a, b2a, w2b, b2b)


if __name__ == "__main__":
    key = jax.random.PRNGKey(0)
    k_q, k_s, k_p = jax.random.split(key, 3)

    qvals = jax.random.normal(k_q, (B, T, N_AGENTS), jnp.float32)
    states = jax.random.normal(k_s, (B, T, STATE_DIM), jnp.float32)
    params = make_params(k_p)

    # Fused weights are built once (outside the forward path).
    fused_params = jax.block_until_ready(fuse_mixer_params(params))

    w1, w2 = mixer_forward(qvals, states, fused_params)
    jax.block_until_ready((w1, w2))

    w1_ref, w2_ref = mixer_ref(qvals, states, params)
    assert w1.shape == (B * T, N_AGENTS, EMBED_DIM)
    assert w2.shape == (B * T, EMBED_DIM, 1)
    assert jnp.allclose(w1, w1_ref, atol=1e-5, rtol=1e-5)
    assert jnp.allclose(w2, w2_ref, atol=1e-5, rtol=1e-5)

    print("KERNEL_OK")
</pallas_src>

<mosaic_0001>
module attributes {stable_mosaic.version = 11 : i64} {
  func.func @mixer_kernel(%arg0: i32, %arg1: memref<8x32xf32, #tpu.memory_space<vmem>>, %arg2: memref<32x128xf32, #tpu.memory_space<vmem>>, %arg3: memref<1x128xf32, #tpu.memory_space<vmem>>, %arg4: memref<128x128xf32, #tpu.memory_space<vmem>>, %arg5: memref<1x128xf32, #tpu.memory_space<vmem>>, %arg6: memref<128x32xf32, #tpu.memory_space<vmem>>, %arg7: memref<1x32xf32, #tpu.memory_space<vmem>>, %arg8: memref<8x128xf32, #tpu.memory_space<vmem>>, %arg9: memref<8x32xf32, #tpu.memory_space<vmem>>) attributes {dimension_semantics = [#tpu.dimension_semantics<parallel>], iteration_bounds = array<i64: 2>, scalar_prefetch = 0 : i64, scratch_operands = 0 : i64, tpu.core_type = #tpu.core_type<tc>, window_params = [{transform_indices = @transform_0, window_bounds = array<i64: 8, 32>}, {pipeline_mode = #tpu.pipeline_mode<synchronous>, transform_indices = @transform_1, window_bounds = array<i64: 32, 128>}, {pipeline_mode = #tpu.pipeline_mode<synchronous>, transform_indices = @transform_2, window_bounds = array<i64: 1, 128>}, {pipeline_mode = #tpu.pipeline_mode<synchronous>, transform_indices = @transform_3, window_bounds = array<i64: 128, 128>}, {pipeline_mode = #tpu.pipeline_mode<synchronous>, transform_indices = @transform_4, window_bounds = array<i64: 1, 128>}, {pipeline_mode = #tpu.pipeline_mode<synchronous>, transform_indices = @transform_5, window_bounds = array<i64: 128, 32>}, {pipeline_mode = #tpu.pipeline_mode<synchronous>, transform_indices = @transform_6, window_bounds = array<i64: 1, 32>}, {transform_indices = @transform_7, window_bounds = array<i64: 8, 128>}, {transform_indices = @transform_8, window_bounds = array<i64: 8, 32>}]} {
    %c0 = arith.constant 0 : index
    %c0_0 = arith.constant 0 : index
    %0 = vector.load %arg1[%c0, %c0_0] : memref<8x32xf32, #tpu.memory_space<vmem>>, vector<8x32xf32>
    %c0_1 = arith.constant 0 : index
    %c0_2 = arith.constant 0 : index
    %1 = vector.load %arg2[%c0_1, %c0_2] : memref<32x128xf32, #tpu.memory_space<vmem>>, vector<32x128xf32>
    %cst = arith.constant dense<0.000000e+00> : vector<8x128xf32>
    %2 = tpu.matmul %0, %1, %cst {dimension_numbers = #tpu.dot_dimension_numbers<[1], [0], [0], [1], [0, 0, 1, 1], [], []>} : vector<8x32xf32>, vector<32x128xf32>, vector<8x128xf32> -> vector<8x128xf32>
    %c0_3 = arith.constant 0 : index
    %c0_4 = arith.constant 0 : index
    %3 = vector.load %arg3[%c0_3, %c0_4] : memref<1x128xf32, #tpu.memory_space<vmem>>, vector<1x128xf32>
    %4 = vector.broadcast %3 : vector<1x128xf32> to vector<8x128xf32>
    %5 = arith.addf %2, %4 : vector<8x128xf32>
    %cst_5 = arith.constant 0.000000e+00 : f32
    %6 = vector.broadcast %cst_5 : f32 to vector<8x128xf32>
    %7 = arith.maximumf %5, %6 : vector<8x128xf32>
    %c0_6 = arith.constant 0 : index
    %c0_7 = arith.constant 0 : index
    %8 = vector.load %arg4[%c0_6, %c0_7] : memref<128x128xf32, #tpu.memory_space<vmem>>, vector<128x128xf32>
    %cst_8 = arith.constant dense<0.000000e+00> : vector<8x128xf32>
    %9 = tpu.matmul %7, %8, %cst_8 {dimension_numbers = #tpu.dot_dimension_numbers<[1], [0], [0], [1], [0, 0, 1, 1], [], []>} : vector<8x128xf32>, vector<128x128xf32>, vector<8x128xf32> -> vector<8x128xf32>
    %c0_9 = arith.constant 0 : index
    %c0_10 = arith.constant 0 : index
    %10 = vector.load %arg5[%c0_9, %c0_10] : memref<1x128xf32, #tpu.memory_space<vmem>>, vector<1x128xf32>
    %11 = vector.broadcast %10 : vector<1x128xf32> to vector<8x128xf32>
    %12 = arith.addf %9, %11 : vector<8x128xf32>
    %13 = math.absf %12 : vector<8x128xf32>
    %c0_11 = arith.constant 0 : index
    %c0_12 = arith.constant 0 : index
    %14 = vector.load %arg8[%c0_11, %c0_12] : memref<8x128xf32, #tpu.memory_space<vmem>>, vector<8x128xf32>
    tpu.vector_store %arg8[%c0_11, %c0_12], %13 {strides = array<i32>} : memref<8x128xf32, #tpu.memory_space<vmem>>, vector<8x128xf32>,
    %c0_13 = arith.constant 0 : index
    %c0_14 = arith.constant 0 : index
    %15 = vector.load %arg6[%c0_13, %c0_14] : memref<128x32xf32, #tpu.memory_space<vmem>>, vector<128x32xf32>
    %cst_15 = arith.constant dense<0.000000e+00> : vector<8x32xf32>
    %16 = tpu.matmul %7, %15, %cst_15 {dimension_numbers = #tpu.dot_dimension_numbers<[1], [0], [0], [1], [0, 0, 1, 1], [], []>} : vector<8x128xf32>, vector<128x32xf32>, vector<8x32xf32> -> vector<8x32xf32>
    %c0_16 = arith.constant 0 : index
    %c0_17 = arith.constant 0 : index
    %17 = vector.load %arg7[%c0_16, %c0_17] : memref<1x32xf32, #tpu.memory_space<vmem>>, vector<1x32xf32>
    %18 = vector.broadcast %17 : vector<1x32xf32> to vector<8x32xf32>
    %19 = arith.addf %16, %18 : vector<8x32xf32>
    %20 = math.absf %19 : vector<8x32xf32>
    %c0_18 = arith.constant 0 : index
    %c0_19 = arith.constant 0 : index
    %21 = vector.load %arg9[%c0_18, %c0_19] : memref<8x32xf32, #tpu.memory_space<vmem>>, vector<8x32xf32>
    tpu.vector_store %arg9[%c0_18, %c0_19], %20 {strides = array<i32>} : memref<8x32xf32, #tpu.memory_space<vmem>>, vector<8x32xf32>,
    return
  }
  func.func @transform_0(%arg0: i32) -> (i32, i32) {
    %c0_i32 = arith.constant 0 : i32
    %c0_i32_0 = arith.constant 0 : i32
    return %arg0, %c0_i32 : i32, i32
  }
  func.func @transform_1(%arg0: i32) -> (i32, i32) {
    %c0_i32 = arith.constant 0 : i32
    %c0_i32_0 = arith.constant 0 : i32
    %c0_i32_1 = arith.constant 0 : i32
    return %c0_i32, %c0_i32_0 : i32, i32
  }
  func.func @transform_2(%arg0: i32) -> (i32, i32) {
    %c0_i32 = arith.constant 0 : i32
    %c0_i32_0 = arith.constant 0 : i32
    %c0_i32_1 = arith.constant 0 : i32
    return %c0_i32, %c0_i32_0 : i32, i32
  }
  func.func @transform_3(%arg0: i32) -> (i32, i32) {
    %c0_i32 = arith.constant 0 : i32
    %c0_i32_0 = arith.constant 0 : i32
    %c0_i32_1 = arith.constant 0 : i32
    return %c0_i32, %c0_i32_0 : i32, i32
  }
  func.func @transform_4(%arg0: i32) -> (i32, i32) {
    %c0_i32 = arith.constant 0 : i32
    %c0_i32_0 = arith.constant 0 : i32
    %c0_i32_1 = arith.constant 0 : i32
    return %c0_i32, %c0_i32_0 : i32, i32
  }
  func.func @transform_5(%arg0: i32) -> (i32, i32) {
    %c0_i32 = arith.constant 0 : i32
    %c0_i32_0 = arith.constant 0 : i32
    %c0_i32_1 = arith.constant 0 : i32
    return %c0_i32, %c0_i32_0 : i32, i32
  }
  func.func @transform_6(%arg0: i32) -> (i32, i32) {
    %c0_i32 = arith.constant 0 : i32
    %c0_i32_0 = arith.constant 0 : i32
    %c0_i32_1 = arith.constant 0 : i32
    return %c0_i32, %c0_i32_0 : i32, i32
  }
  func.func @transform_7(%arg0: i32) -> (i32, i32) {
    %c0_i32 = arith.constant 0 : i32
    %c0_i32_0 = arith.constant 0 : i32
    return %arg0, %c0_i32 : i32, i32
  }
  func.func @transform_8(%arg0: i32) -> (i32, i32) {
    %c0_i32 = arith.constant 0 : i32
    %c0_i32_0 = arith.constant 0 : i32
    return %arg0, %c0_i32 : i32, i32
  }
}

</mosaic_0001>

<llo_original>
// kernel: tpu_custom_call.1
$region0: #{tpu_custom_call.1}
  #allocation0 [shape = 'u32[]', space=smem, size = 0x4, offset = 0x4, fixed_abs, tag = 'smem constant byte address 0x4 - core index']
  #allocation1 [shape = 'u32[144,128]{1,0:T(1,128)}', space=vmem, size = 0x12000, scoped, tag = 'internal scratch']
  %s0 = inlined_call_operand.hbm [shape: f32[16,32], index: 0, kind: input, shape index: {}]
  %s1 = inlined_call_operand.vmem [shape: f32[32,128], index: 1, kind: input, shape index: {}]
  %s2 = inlined_call_operand.vmem [shape: f32[1,128], index: 2, kind: input, shape index: {}]
  %s3 = inlined_call_operand.vmem [shape: f32[128,128], index: 3, kind: input, shape index: {}]
  %s4 = inlined_call_operand.vmem [shape: f32[1,128], index: 4, kind: input, shape index: {}]
  %s5 = inlined_call_operand.vmem [shape: f32[128,32], index: 5, kind: input, shape index: {}]
  %s6 = inlined_call_operand.vmem [shape: f32[1,32], index: 6, kind: input, shape index: {}]
  %s7 = inlined_call_operand.hbm [shape: f32[16,128], index: 7, kind: output, shape index: {0}]
  %s8 = inlined_call_operand.hbm [shape: f32[16,32], index: 8, kind: output, shape index: {1}]
  %9 = xla_tuple %s7, %s8
  %s10 = sld [smem:[#allocation0]]
  $region73: #{tpu_custom_call.1} parent=0
    _
  %s12 = ssub.s32 1, %s10
  %s13 = scalar_select 0, %s12, %s10
  $region1: #{tpu_custom_call.1} parent=0
    #allocation2 [shape = 'u8[8192]{0}', space=vmem, size = 0x2000, scoped, tag = 'input window, operand 0']
    #allocation3 [shape = 's32[2]{0}', space=sflag, size = 0x8, scoped, tag = 'scoped memory for tpu_custom_call.1']
    #allocation4 [shape = 's32[2]{0}', space=sflag, size = 0x8, scoped, tag = 'scoped memory for tpu_custom_call.1']
    #allocation5 [shape = 'u8[8192]{0}', space=vmem, size = 0x2000, scoped, tag = 'output window, operand 0']
    #allocation6 [shape = 'u8[8192]{0}', space=vmem, size = 0x2000, scoped, tag = 'output window, operand 1']
    #allocation7 [shape = 's32[2]{0}', space=sflag, size = 0x8, scoped, tag = 'scoped memory for tpu_custom_call.1']
    %14 = vsyncpa [#allocation3], 0
    %s15 = scalar_lea.sflag [#allocation3], 1
    %16 = vsyncpa %s15, 0
    %17 = vsyncpa [#allocation4], 0
    %s18 = scalar_lea.sflag [#allocation4], 1
    %19 = vsyncpa %s18, 0
    %20 = vsyncpa [#allocation7], 0
    %s21 = scalar_lea.sflag [#allocation7], 1
    %22 = vsyncpa %s21, 0
    loop: start=0, step=1, limit=4
    $region2: #{tpu_custom_call.1} parent=1 // loop_pre_header
      _
    $region3: #{tpu_custom_call.1} parent=1 // loop_header
      %s24 = sphi 0, %s28
      %p25 = scmp.ge.s32.totalorder %s24, 4
      %s34 = sphi 0, %s36
      %s37 = sphi 0, %s34
      %s38 = sphi 0, %s37
      %s54 = sphi 0, %s38
      %s58 = sphi 0, %s58
      %s60 = sphi 0, %s58
      %s61 = sphi 0, %s60
      %s75 = sphi 0, %s61
      %s79 = sphi 0, %s79
      %s81 = sphi 0, %s79
      %s82 = sphi 0, %s81
      %s96 = sphi 0, %s82
      %s100 = sphi 0, %s100
      %s102 = sphi 0, %s100
      %s103 = sphi 0, %s102
      %s117 = sphi 0, %s103
      %s121 = sphi 0, %s121
      %s123 = sphi 0, %s121
      %s124 = sphi 0, %s123
      %s138 = sphi 0, %s124
      %s142 = sphi 0, %s142
      %s144 = sphi 0, %s142
      %s145 = sphi 0, %s144
      %s159 = sphi 0, %s145
      %s163 = sphi 0, %s163
      %s165 = sphi 0, %s163
      %s166 = sphi 0, %s165
      %s180 = sphi 0, %s166
      %s186 = sphi 0, %s188
      %s189 = sphi 0, %s186
      %s190 = sphi 0, %s189
      %s206 = sphi 0, %s190
      %s212 = sphi 0, %s214
      %s215 = sphi 0, %s212
      %s216 = sphi 0, %s215
      %s232 = sphi 0, %s216
    $region4: #{tpu_custom_call.1} parent=1 // loop_header_branch
      %27 = sbr.rel (%p25) target = $region8
    $region5: #{tpu_custom_call.1} parent=1 // loop_body
      %s29 = ssub.s32 %s24, 1
      %s30 = ssub.s32 %s24, 2
      %s31 = sadd.s32 %s24, 1
      %s32 = ssub.s32 %s24, %s31
      %p33 = scmp.eq.s32.totalorder %s32, 0
      %s35 = sadd.s32 %s34, 1
      %s36 = scalar_select %p33, %s34, %s35
      %p39 = pneg %p33
      %p40 = scmp.eq.s32.totalorder %s24, 1
      %p41 = por %p39, %p40
      %p42 = scmp.ne.s32.totalorder %s34, %s37
      %p43 = scmp.eq.s32.totalorder %s24, 0
      %p44 = por %p42, %p43
      %p45 = scmp.ne.s32.totalorder %s34, %s37
      %p46 = scmp.eq.s32.totalorder %s29, 1
      %p47 = por %p45, %p46
      %p48 = scmp.ne.s32.totalorder %s37, %s38
      %p49 = scmp.eq.s32.totalorder %s29, 0
      %p50 = por %p48, %p49
      %p51 = scmp.ne.s32.totalorder %s37, %s38
      %p52 = scmp.eq.s32.totalorder %s30, 1
      %p53 = por %p51, %p52
      %p55 = scmp.ne.s32.totalorder %s38, %s54
      %p56 = scmp.eq.s32.totalorder %s30, 0
      %p57 = por %p55, %p56
      %s59 = sadd.s32 %s58, 1
      %p62 = scmp.eq.s32.totalorder %s24, 1
      %p63 = scmp.ne.s32.totalorder %s58, %s60
      %p64 = scmp.eq.s32.totalorder %s24, 0
      %p65 = por %p63, %p64
      %p66 = scmp.ne.s32.totalorder %s58, %s60
      %p67 = scmp.eq.s32.totalorder %s29, 1
      %p68 = por %p66, %p67
      %p69 = scmp.ne.s32.totalorder %s60, %s61
      %p70 = scmp.eq.s32.totalorder %s29, 0
      %p71 = por %p69, %p70
      %p72 = scmp.ne.s32.totalorder %s60, %s61
      %p73 = scmp.eq.s32.totalorder %s30, 1
      %p74 = por %p72, %p73
      %p76 = scmp.ne.s32.totalorder %s61, %s75
      %p77 = scmp.eq.s32.totalorder %s30, 0
      %p78 = por %p76, %p77
      %s80 = sadd.s32 %s79, 1
      %p83 = scmp.eq.s32.totalorder %s24, 1
      %p84 = scmp.ne.s32.totalorder %s79, %s81
      %p85 = scmp.eq.s32.totalorder %s24, 0
      %p86 = por %p84, %p85
      %p87 = scmp.ne.s32.totalorder %s79, %s81
      %p88 = scmp.eq.s32.totalorder %s29, 1
      %p89 = por %p87, %p88
      %p90 = scmp.ne.s32.totalorder %s81, %s82
      %p91 = scmp.eq.s32.totalorder %s29, 0
      %p92 = por %p90, %p91
      %p93 = scmp.ne.s32.totalorder %s81, %s82
      %p94 = scmp.eq.s32.totalorder %s30, 1
      %p95 = por %p93, %p94
      %p97 = scmp.ne.s32.totalorder %s82, %s96
      %p98 = scmp.eq.s32.totalorder %s30, 0
      %p99 = por %p97, %p98
      %s101 = sadd.s32 %s100, 1
      %p104 = scmp.eq.s32.totalorder %s24, 1
      %p105 = scmp.ne.s32.totalorder %s100, %s102
      %p106 = scmp.eq.s32.totalorder %s24, 0
      %p107 = por %p105, %p106
      %p108 = scmp.ne.s32.totalorder %s100, %s102
      %p109 = scmp.eq.s32.totalorder %s29, 1
      %p110 = por %p108, %p109
      %p111 = scmp.ne.s32.totalorder %s102, %s103
      %p112 = scmp.eq.s32.totalorder %s29, 0
      %p113 = por %p111, %p112
      %p114 = scmp.ne.s32.totalorder %s102, %s103
      %p115 = scmp.eq.s32.totalorder %s30, 1
      %p116 = por %p114, %p115
      %p118 = scmp.ne.s32.totalorder %s103, %s117
      %p119 = scmp.eq.s32.totalorder %s30, 0
      %p120 = por %p118, %p119
      %s122 = sadd.s32 %s121, 1
      %p125 = scmp.eq.s32.totalorder %s24, 1
      %p126 = scmp.ne.s32.totalorder %s121, %s123
      %p127 = scmp.eq.s32.totalorder %s24, 0
      %p128 = por %p126, %p127
      %p129 = scmp.ne.s32.totalorder %s121, %s123
      %p130 = scmp.eq.s32.totalorder %s29, 1
      %p131 = por %p129, %p130
      %p132 = scmp.ne.s32.totalorder %s123, %s124
      %p133 = scmp.eq.s32.totalorder %s29, 0
      %p134 = por %p132, %p133
      %p135 = scmp.ne.s32.totalorder %s123, %s124
      %p136 = scmp.eq.s32.totalorder %s30, 1
      %p137 = por %p135, %p136
      %p139 = scmp.ne.s32.totalorder %s124, %s138
      %p140 = scmp.eq.s32.totalorder %s30, 0
      %p141 = por %p139, %p140
      %s143 = sadd.s32 %s142, 1
      %p146 = scmp.eq.s32.totalorder %s24, 1
      %p147 = scmp.ne.s32.totalorder %s142, %s144
      %p148 = scmp.eq.s32.totalorder %s24, 0
      %p149 = por %p147, %p148
      %p150 = scmp.ne.s32.totalorder %s142, %s144
      %p151 = scmp.eq.s32.totalorder %s29, 1
      %p152 = por %p150, %p151
      %p153 = scmp.ne.s32.totalorder %s144, %s145
      %p154 = scmp.eq.s32.totalorder %s29, 0
      %p155 = por %p153, %p154
      %p156 = scmp.ne.s32.totalorder %s144, %s145
      %p157 = scmp.eq.s32.totalorder %s30, 1
      %p158 = por %p156, %p157
      %p160 = scmp.ne.s32.totalorder %s145, %s159
      %p161 = scmp.eq.s32.totalorder %s30, 0
      %p162 = por %p160, %p161
      %s164 = sadd.s32 %s163, 1
      %p167 = scmp.eq.s32.totalorder %s24, 1
      %p168 = scmp.ne.s32.totalorder %s163, %s165
      %p169 = scmp.eq.s32.totalorder %s24, 0
      %p170 = por %p168, %p169
      %p171 = scmp.ne.s32.totalorder %s163, %s165
      %p172 = scmp.eq.s32.totalorder %s29, 1
      %p173 = por %p171, %p172
      %p174 = scmp.ne.s32.totalorder %s165, %s166
      %p175 = scmp.eq.s32.totalorder %s29, 0
      %p176 = por %p174, %p175
      %p177 = scmp.ne.s32.totalorder %s165, %s166
      %p178 = scmp.eq.s32.totalorder %s30, 1
      %p179 = por %p177, %p178
      %p181 = scmp.ne.s32.totalorder %s166, %s180
      %p182 = scmp.eq.s32.totalorder %s30, 0
      %p183 = por %p181, %p182
      %s184 = ssub.s32 %s24, %s31
      %p185 = scmp.eq.s32.totalorder %s184, 0
      %s187 = sadd.s32 %s186, 1
      %s188 = scalar_select %p185, %s186, %s187
      %p191 = pneg %p185
      %p192 = scmp.eq.s32.totalorder %s24, 1
      %p193 = por %p191, %p192
      %p194 = scmp.ne.s32.totalorder %s186, %s189
      %p195 = scmp.eq.s32.totalorder %s24, 0
      %p196 = por %p194, %p195
      %p197 = scmp.ne.s32.totalorder %s186, %s189
      %p198 = scmp.eq.s32.totalorder %s29, 1
      %p199 = por %p197, %p198
      %p200 = scmp.ne.s32.totalorder %s189, %s190
      %p201 = scmp.eq.s32.totalorder %s29, 0
      %p202 = por %p200, %p201
      %p203 = scmp.ne.s32.totalorder %s189, %s190
      %p204 = scmp.eq.s32.totalorder %s30, 1
      %p205 = por %p203, %p204
      %p207 = scmp.ne.s32.totalorder %s190, %s206
      %p208 = scmp.eq.s32.totalorder %s30, 0
      %p209 = por %p207, %p208
      %s210 = ssub.s32 %s24, %s31
      %p211 = scmp.eq.s32.totalorder %s210, 0
      %s213 = sadd.s32 %s212, 1
      %s214 = scalar_select %p211, %s212, %s213
      %p217 = pneg %p211
      %p218 = scmp.eq.s32.totalorder %s24, 1
      %p219 = por %p217, %p218
      %p220 = scmp.ne.s32.totalorder %s212, %s215
      %p221 = scmp.eq.s32.totalorder %s24, 0
      %p222 = por %p220, %p221
      %p223 = scmp.ne.s32.totalorder %s212, %s215
      %p224 = scmp.eq.s32.totalorder %s29, 1
      %p225 = por %p223, %p224
      %p226 = scmp.ne.s32.totalorder %s215, %s216
      %p227 = scmp.eq.s32.totalorder %s29, 0
      %p228 = por %p226, %p227
      %p229 = scmp.ne.s32.totalorder %s215, %s216
      %p230 = scmp.eq.s32.totalorder %s30, 1
      %p231 = por %p229, %p230
      %p233 = scmp.ne.s32.totalorder %s216, %s232
      %p234 = scmp.eq.s32.totalorder %s30, 0
      %p235 = por %p233, %p234
      %p236 = scmp.le.s32.totalorder 1, %s24
      %p237 = scmp.lt.s32.totalorder %s24, 3
      %p238 = pnand %p236, %p237
      %p239 = pneg %p238
      // Predicated region
      $region9: #{tpu_custom_call.1} parent=5 // pred_check
        _
      $region10: #{tpu_custom_call.1} parent=5 // pred_check_branch
        %241 = sbr.rel (%p238) target = $region12
      $region11: #{tpu_custom_call.1} parent=5 // pred_region
        %s242 = ssub.s32 %s24, 1
        // Predicated region
        $region13: #{tpu_custom_call.1} parent=11 // pred_check
          %p243 = pneg %p71
        $region14: #{tpu_custom_call.1} parent=11 // pred_check_branch
          %245 = sbr.rel (%p243) target = $region16
        $region15: #{tpu_custom_call.1} parent=11 // pred_region
          _
        $region16: #{tpu_custom_call.1} parent=11 // pred_fallthru
          _
        // Predicated region
        $region17: #{tpu_custom_call.1} parent=11 // pred_check
          %p246 = pneg %p92
        $region18: #{tpu_custom_call.1} parent=11 // pred_check_branch
          %248 = sbr.rel (%p246) target = $region20
        $region19: #{tpu_custom_call.1} parent=11 // pred_region
          _
        $region20: #{tpu_custom_call.1} parent=11 // pred_fallthru
          _
        // Predicated region
        $region21: #{tpu_custom_call.1} parent=11 // pred_check
          %p249 = pneg %p113
        $region22: #{tpu_custom_call.1} parent=11 // pred_check_branch
          %251 = sbr.rel (%p249) target = $region24
        $region23: #{tpu_custom_call.1} parent=11 // pred_region
          _
        $region24: #{tpu_custom_call.1} parent=11 // pred_fallthru
          _
        // Predicated region
        $region25: #{tpu_custom_call.1} parent=11 // pred_check
          %p252 = pneg %p134
        $region26: #{tpu_custom_call.1} parent=11 // pred_check_branch
          %254 = sbr.rel (%p252) target = $region28
        $region27: #{tpu_custom_call.1} parent=11 // pred_region
          _
        $region28: #{tpu_custom_call.1} parent=11 // pred_fallthru
          _
        // Predicated region
        $region29: #{tpu_custom_call.1} parent=11 // pred_check
          %p255 = pneg %p155
        $region30: #{tpu_custom_call.1} parent=11 // pred_check_branch
          %257 = sbr.rel (%p255) target = $region32
        $region31: #{tpu_custom_call.1} parent=11 // pred_region
          _
        $region32: #{tpu_custom_call.1} parent=11 // pred_fallthru
          _
        // Predicated region
        $region33: #{tpu_custom_call.1} parent=11 // pred_check
          %p258 = pneg %p176
        $region34: #{tpu_custom_call.1} parent=11 // pred_check_branch
          %260 = sbr.rel (%p258) target = $region36
        $region35: #{tpu_custom_call.1} parent=11 // pred_region
          _
        $region36: #{tpu_custom_call.1} parent=11 // pred_fallthru
          _
      $region12: #{tpu_custom_call.1} parent=5 // pred_fallthru
        _
      %p261 = scmp.lt.s32.totalorder %s24, 2
      // Predicated region
      $region37: #{tpu_custom_call.1} parent=5 // pred_check
        %p262 = pneg %p261
      $region38: #{tpu_custom_call.1} parent=5 // pred_check_branch
        %264 = sbr.rel (%p262) target = $region40
      $region39: #{tpu_custom_call.1} parent=5 // pred_region
        // Predicated region
        $region41: #{tpu_custom_call.1} parent=39 // pred_check
          %p265 = pneg %p44
        $region42: #{tpu_custom_call.1} parent=39 // pred_check_branch
          %267 = sbr.rel (%p265) target = $region44
        $region43: #{tpu_custom_call.1} parent=39 // pred_region
          %s268 = sand.u32 %s34, 1
          %s269 = scalar_lea.sflag [#allocation3], %s268
          %s270 = sand.u32 %s34, 1
          %s271 = smul.addr %s270, 8
          %s272 = scalar_lea.vmem [#allocation2], %s271
          %s274 = ssub.s32 128, 128
          %275 = vsyncadd %s269, %s274
          %s276 = smul.addr %s24, 128
          %s277 = scalar_lea.hbm %s0, %s276
          %s279 = sshll.u32 %s272, 4
          %s280 = int_to_ptr.vmem [resolvable:$true] %s279
          %282 = dma.hbm_to_vmem [thread:$0]  %s277, 128, %s280, %s269
        $region44: #{tpu_custom_call.1} parent=39 // pred_fallthru
          _
      $region40: #{tpu_custom_call.1} parent=5 // pred_fallthru
        _
      %p283 = scmp.le.s32.totalorder 1, %s24
      %p284 = scmp.lt.s32.totalorder %s24, 3
      %p285 = pnand %p283, %p284
      %p286 = pneg %p285
      // Predicated region
      $region45: #{tpu_custom_call.1} parent=5 // pred_check
        _
      $region46: #{tpu_custom_call.1} parent=5 // pred_check_branch
        %288 = sbr.rel (%p285) target = $region48
      $region47: #{tpu_custom_call.1} parent=5 // pred_region
        %s289 = ssub.s32 %s24, 1
        %s290 = sand.u32 %s37, 1
        %s291 = scalar_lea.sflag [#allocation3], %s290
        %s292 = sand.u32 %s37, 1
        %s293 = smul.addr %s292, 8
        %s294 = scalar_lea.vmem [#allocation2], %s293
        // Predicated region
        $region49: #{tpu_custom_call.1} parent=47 // pred_check
          %p295 = pneg %p50
        $region50: #{tpu_custom_call.1} parent=47 // pred_check_branch
          %297 = sbr.rel (%p295) target = $region52
        $region51: #{tpu_custom_call.1} parent=47 // pred_region
          %298 = dma.done %s291, 128
        $region52: #{tpu_custom_call.1} parent=47 // pred_fallthru
          _
        %s299 = sand.u32 %s37, 1
        %s300 = scalar_lea.sflag [#allocation3], %s299
        %s301 = sand.u32 %s37, 1
        %s302 = smul.addr %s301, 8
        %s303 = scalar_lea.vmem [#allocation2], %s302
        %p304 = pneg %p50
        %p305 = pneg %p47
        %p306 = pneg %p71
        %p307 = pneg %p68
        %p308 = pneg %p92
        %p309 = pneg %p89
        %p310 = pneg %p113
        %p311 = pneg %p110
        %p312 = pneg %p134
        %p313 = pneg %p131
        %p314 = pneg %p155
        %p315 = pneg %p152
        %p316 = pneg %p176
        %p317 = pneg %p173
        %p318 = pneg %p202
        %p319 = pneg %p199
        %s320 = sand.u32 %s189, 1
        %s321 = scalar_lea.sflag [#allocation4], %s320
        %s322 = sand.u32 %s189, 1
        %s323 = smul.addr %s322, 8
        %s324 = scalar_lea.vmem [#allocation5], %s323
        %p325 = pneg %p228
        %p326 = pneg %p225
        %s327 = sand.u32 %s215, 1
        %s328 = scalar_lea.sflag [#allocation7], %s327
        %s329 = sand.u32 %s215, 1
        %s330 = smul.addr %s329, 8
        %s331 = scalar_lea.vmem [#allocation6], %s330
        %v332 = vld [vmem:[%s294] sm:$0xff]
        %v333 = vld [vmem:[%s1] sm:$0xff]
        %v334 = vld [vmem:[%s1 + $0x8] sm:$0xff]
        %v335 = vld [vmem:[%s1 + $0x10] sm:$0xff]
        %v336 = vld [vmem:[%s1 + $0x18] sm:$0xff]
        %v337 = vld [vmem:[%s2] sm:$0x1]
        %v339 = vlaneseq
        %v340 = vshrl.u32 %v339, 7
        %v341 = vsub.s32 0, %v340
        %v342 = vrot.slane %v337, %v341
        %vm344 = vcmask 261120
        %v346 = vsel %vm344, %v332, 0
        %348 = vmatprep.subr.mxu0 0.0
        %349 = vmatpush1.msra.mxu0 %v333
        %350 = vmatprep.subr.mxu0 0.0
        %351 = vmatpush1.msra.mxu0 %v334
        %352 = vmatprep.subr.mxu0 0.0
        %353 = vmatpush1.msra.mxu0 %v335
        %354 = vmatprep.subr.mxu0 0.0
        %355 = vmatpush1.msra.mxu0 %v336
        %356 = vmatprep.subr.mxu0 0.0
        %357 = vmatpush1.msra.mxu0 0.0
        %358 = vmatprep.subr.mxu0 0.0
        %359 = vmatpush1.msra.mxu0 0.0
        %360 = vmatprep.subr.mxu0 0.0
        %361 = vmatpush1.msra.mxu0 0.0
        %362 = vmatprep.subr.mxu0 0.0
        %363 = vmatpush1.msra.mxu0 0.0
        %364 = vmatprep.subr.mxu0 0.0
        %365 = vmatpush1.msra.mxu0 0.0
        %366 = vmatprep.subr.mxu0 0.0
        %367 = vmatpush1.msra.mxu0 0.0
        %368 = vmatprep.subr.mxu0 0.0
        %369 = vmatpush1.msra.mxu0 0.0
        %370 = vmatprep.subr.mxu0 0.0
        %371 = vmatpush1.msra.mxu0 0.0
        %372 = vmatprep.subr.mxu0 0.0
        %373 = vmatpush1.msra.mxu0 0.0
        %374 = vmatprep.subr.mxu0 0.0
        %375 = vmatpush1.msra.mxu0 0.0
        %376 = vmatprep.subr.mxu0 0.0
        %377 = vmatpush1.msra.mxu0 0.0
        %378 = vmatprep.subr.mxu0 0.0
        %379 = vmatpush1.msra.mxu0 0.0
        %380 = vmatprep.subr.mxu0 0.0
        %381 = vmatpush1.msra.mxu0 0.0
        %382 = vmatprep.subr.mxu0 0.0
        %383 = vmatpush1.msra.mxu0 0.0
        %384 = vmatprep.subr.mxu0 0.0
        %385 = vmatpush1.msra.mxu0 0.0
        %386 = vmatprep.subr.mxu0 0.0
        %387 = vmatpush1.msra.mxu0 0.0
        %388 = vmatprep.subr.mxu0 0.0
        %389 = vmatpush1.msra.mxu0 0.0
        %390 = vmatprep.subr.mxu0 0.0
        %391 = vmatpush1.msra.mxu0 0.0
        %392 = vmatprep.subr.mxu0 0.0
        %393 = vmatpush1.msra.mxu0 0.0
        %394 = vmatprep.subr.mxu0 0.0
        %395 = vmatpush1.msra.mxu0 0.0
        %396 = vmatprep.subr.mxu0 0.0
        %397 = vmatpush1.msra.mxu0 0.0
        %398 = vmatprep.subr.mxu0 0.0
        %399 = vmatpush1.msra.mxu0 0.0
        %400 = vmatprep.subr.mxu0 0.0
        %401 = vmatpush1.msra.mxu0 0.0
        %402 = vmatprep.subr.mxu0 0.0
        %403 = vmatpush1.msra.mxu0 0.0
        %404 = vmatprep.subr.mxu0 0.0
        %405 = vmatpush1.msra.mxu0 0.0
        %406 = vmatprep.subr.mxu0 0.0
        %407 = vmatpush1.msra.mxu0 0.0
        %408 = vmatprep.subr.mxu0 0.0
        %409 = vmatpush1.msra.mxu0 0.0
        %410 = vmatprep.subr.mxu0 0.0
        %411 = vmatpush1.msra.mxu0 0.0
        %412 = vmatprep.mubr.f32.mxu0 0.0
        %413 = vmatmul.mubr.f32.gmra.mrb[0].mxu0 %v346
        %v414 = vpop.f32.mrb[0].mxu0
        %v415 = vadd.f32 %v342, %v414
        %v416 = vpop.f32.mrb[0].mxu0
        %417 = vdwg.mxu0
        %v418 = vmax.f32 %v415, 0.0
        %v419 = vld [vmem:[%s3] sm:$0xff]
        %v420 = vld [vmem:[%s3 + $0x8] sm:$0xff]
        %v421 = vld [vmem:[%s3 + $0x10] sm:$0xff]
        %v422 = vld [vmem:[%s3 + $0x18] sm:$0xff]
        %v423 = vld [vmem:[%s3 + $0x20] sm:$0xff]
        %v424 = vld [vmem:[%s3 + $0x28] sm:$0xff]
        %v425 = vld [vmem:[%s3 + $0x30] sm:$0xff]
        %v426 = vld [vmem:[%s3 + $0x38] sm:$0xff]
        %v427 = vld [vmem:[%s3 + $0x40] sm:$0xff]
        %v428 = vld [vmem:[%s3 + $0x48] sm:$0xff]
        %v429 = vld [vmem:[%s3 + $0x50] sm:$0xff]
        %v430 = vld [vmem:[%s3 + $0x58] sm:$0xff]
        %v431 = vld [vmem:[%s3 + $0x60] sm:$0xff]
        %v432 = vld [vmem:[%s3 + $0x68] sm:$0xff]
        %v433 = vld [vmem:[%s3 + $0x70] sm:$0xff]
        %v434 = vld [vmem:[%s3 + $0x78] sm:$0xff]
        %v435 = vld [vmem:[%s4] sm:$0x1]
        %v437 = vlaneseq
        %v438 = vshrl.u32 %v437, 7
        %v439 = vsub.s32 0, %v438
        %v440 = vrot.slane %v435, %v439
        %442 = vmatprep.subr.mxu0 0.0
        %443 = vmatpush1.msra.mxu0 %v419
        %444 = vmatprep.subr.mxu0 0.0
        %445 = vmatpush1.msra.mxu0 %v420
        %446 = vmatprep.subr.mxu0 0.0
        %447 = vmatpush1.msra.mxu0 %v421
        %448 = vmatprep.subr.mxu0 0.0
        %449 = vmatpush1.msra.mxu0 %v422
        %450 = vmatprep.subr.mxu0 0.0
        %451 = vmatpush1.msra.mxu0 %v423
        %452 = vmatprep.subr.mxu0 0.0
        %453 = vmatpush1.msra.mxu0 %v424
        %454 = vmatprep.subr.mxu0 0.0
        %455 = vmatpush1.msra.mxu0 %v425
        %456 = vmatprep.subr.mxu0 0.0
        %457 = vmatpush1.msra.mxu0 %v426
        %458 = vmatprep.subr.mxu0 0.0
        %459 = vmatpush1.msra.mxu0 %v427
        %460 = vmatprep.subr.mxu0 0.0
        %461 = vmatpush1.msra.mxu0 %v428
        %462 = vmatprep.subr.mxu0 0.0
        %463 = vmatpush1.msra.mxu0 %v429
        %464 = vmatprep.subr.mxu0 0.0
        %465 = vmatpush1.msra.mxu0 %v430
        %466 = vmatprep.subr.mxu0 0.0
        %467 = vmatpush1.msra.mxu0 %v431
        %468 = vmatprep.subr.mxu0 0.0
        %469 = vmatpush1.msra.mxu0 %v432
        %470 = vmatprep.subr.mxu0 0.0
        %471 = vmatpush1.msra.mxu0 %v433
        %472 = vmatprep.subr.mxu0 0.0
        %473 = vmatpush1.msra.mxu0 %v434
        %474 = vmatprep.subr.mxu0 0.0
        %475 = vmatpush1.msra.mxu0 0.0
        %476 = vmatprep.subr.mxu0 0.0
        %477 = vmatpush1.msra.mxu0 0.0
        %478 = vmatprep.subr.mxu0 0.0
        %479 = vmatpush1.msra.mxu0 0.0
        %480 = vmatprep.subr.mxu0 0.0
        %481 = vmatpush1.msra.mxu0 0.0
        %482 = vmatprep.subr.mxu0 0.0
        %483 = vmatpush1.msra.mxu0 0.0
        %484 = vmatprep.subr.mxu0 0.0
        %485 = vmatpush1.msra.mxu0 0.0
        %486 = vmatprep.subr.mxu0 0.0
        %487 = vmatpush1.msra.mxu0 0.0
        %488 = vmatprep.subr.mxu0 0.0
        %489 = vmatpush1.msra.mxu0 0.0
        %490 = vmatprep.subr.mxu0 0.0
        %491 = vmatpush1.msra.mxu0 0.0
        %492 = vmatprep.subr.mxu0 0.0
        %493 = vmatpush1.msra.mxu0 0.0
        %494 = vmatprep.subr.mxu0 0.0
        %495 = vmatpush1.msra.mxu0 0.0
        %496 = vmatprep.subr.mxu0 0.0
        %497 = vmatpush1.msra.mxu0 0.0
        %498 = vmatprep.subr.mxu0 0.0
        %499 = vmatpush1.msra.mxu0 0.0
        %500 = vmatprep.subr.mxu0 0.0
        %501 = vmatpush1.msra.mxu0 0.0
        %502 = vmatprep.subr.mxu0 0.0
        %503 = vmatpush1.msra.mxu0 0.0
        %504 = vmatprep.subr.mxu0 0.0
        %505 = vmatpush1.msra.mxu0 0.0
        %506 = vmatprep.mubr.f32.mxu0 0.0
        %507 = vmatmul.mubr.f32.gmra.mrb[0].mxu0 %v418
        %v508 = vpop.f32.mrb[0].mxu0
        %v509 = vadd.f32 %v440, %v508
        %v510 = vpop.f32.mrb[0].mxu0
        %511 = vdwg.mxu0
        %v512 = vand.u32 2147483647, %v509
        %513 = vst [vmem:[%s324] sm:$0xff] %v512
        %v514 = vld [vmem:[%s5] sm:$0xff]
        %v515 = vld [vmem:[%s5 + $0x8] sm:$0xff]
        %v516 = vld [vmem:[%s5 + $0x10] sm:$0xff]
        %v517 = vld [vmem:[%s5 + $0x18] sm:$0xff]
        %v518 = vld [vmem:[%s5 + $0x20] sm:$0xff]
        %v519 = vld [vmem:[%s5 + $0x28] sm:$0xff]
        %v520 = vld [vmem:[%s5 + $0x30] sm:$0xff]
        %v521 = vld [vmem:[%s5 + $0x38] sm:$0xff]
        %v522 = vld [vmem:[%s5 + $0x40] sm:$0xff]
        %v523 = vld [vmem:[%s5 + $0x48] sm:$0xff]
        %v524 = vld [vmem:[%s5 + $0x50] sm:$0xff]
        %v525 = vld [vmem:[%s5 + $0x58] sm:$0xff]
        %v526 = vld [vmem:[%s5 + $0x60] sm:$0xff]
        %v527 = vld [vmem:[%s5 + $0x68] sm:$0xff]
        %v528 = vld [vmem:[%s5 + $0x70] sm:$0xff]
        %v529 = vld [vmem:[%s5 + $0x78] sm:$0xff]
        %v530 = vld [vmem:[%s6] sm:$0x1]
        %v532 = vlaneseq
        %v533 = vshrl.u32 %v532, 7
        %v534 = vsub.s32 0, %v533
        %v535 = vrot.slane %v530, %v534
        %537 = vmatprep.subr.mxu0 0.0
        %538 = vmatpush1.msra.mxu0 %v514
        %539 = vmatprep.subr.mxu0 0.0
        %540 = vmatpush1.msra.mxu0 %v515
        %541 = vmatprep.subr.mxu0 0.0
        %542 = vmatpush1.msra.mxu0 %v516
        %543 = vmatprep.subr.mxu0 0.0
        %544 = vmatpush1.msra.mxu0 %v517
        %545 = vmatprep.subr.mxu0 0.0
        %546 = vmatpush1.msra.mxu0 %v518
        %547 = vmatprep.subr.mxu0 0.0
        %548 = vmatpush1.msra.mxu0 %v519
        %549 = vmatprep.subr.mxu0 0.0
        %550 = vmatpush1.msra.mxu0 %v520
        %551 = vmatprep.subr.mxu0 0.0
        %552 = vmatpush1.msra.mxu0 %v521
        %553 = vmatprep.subr.mxu0 0.0
        %554 = vmatpush1.msra.mxu0 %v522
        %555 = vmatprep.subr.mxu0 0.0
        %556 = vmatpush1.msra.mxu0 %v523
        %557 = vmatprep.subr.mxu0 0.0
        %558 = vmatpush1.msra.mxu0 %v524
        %559 = vmatprep.subr.mxu0 0.0
        %560 = vmatpush1.msra.mxu0 %v525
        %561 = vmatprep.subr.mxu0 0.0
        %562 = vmatpush1.msra.mxu0 %v526
        %563 = vmatprep.subr.mxu0 0.0
        %564 = vmatpush1.msra.mxu0 %v527
        %565 = vmatprep.subr.mxu0 0.0
        %566 = vmatpush1.msra.mxu0 %v528
        %567 = vmatprep.subr.mxu0 0.0
        %568 = vmatpush1.msra.mxu0 %v529
        %569 = vmatprep.subr.mxu0 0.0
        %570 = vmatpush1.msra.mxu0 0.0
        %571 = vmatprep.subr.mxu0 0.0
        %572 = vmatpush1.msra.mxu0 0.0
        %573 = vmatprep.subr.mxu0 0.0
        %574 = vmatpush1.msra.mxu0 0.0
        %575 = vmatprep.subr.mxu0 0.0
        %576 = vmatpush1.msra.mxu0 0.0
        %577 = vmatprep.subr.mxu0 0.0
        %578 = vmatpush1.msra.mxu0 0.0
        %579 = vmatprep.subr.mxu0 0.0
        %580 = vmatpush1.msra.mxu0 0.0
        %581 = vmatprep.subr.mxu0 0.0
        %582 = vmatpush1.msra.mxu0 0.0
        %583 = vmatprep.subr.mxu0 0.0
        %584 = vmatpush1.msra.mxu0 0.0
        %585 = vmatprep.subr.mxu0 0.0
        %586 = vmatpush1.msra.mxu0 0.0
        %587 = vmatprep.subr.mxu0 0.0
        %588 = vmatpush1.msra.mxu0 0.0
        %589 = vmatprep.subr.mxu0 0.0
        %590 = vmatpush1.msra.mxu0 0.0
        %591 = vmatprep.subr.mxu0 0.0
        %592 = vmatpush1.msra.mxu0 0.0
        %593 = vmatprep.subr.mxu0 0.0
        %594 = vmatpush1.msra.mxu0 0.0
        %595 = vmatprep.subr.mxu0 0.0
        %596 = vmatpush1.msra.mxu0 0.0
        %597 = vmatprep.subr.mxu0 0.0
        %598 = vmatpush1.msra.mxu0 0.0
        %599 = vmatprep.subr.mxu0 0.0
        %600 = vmatpush1.msra.mxu0 0.0
        %601 = vmatprep.mubr.f32.mxu0 0.0
        %602 = vmatmul.mubr.f32.gmra.mrb[0].mxu0 %v418
        %v603 = vpop.f32.mrb[0].mxu0
        %v604 = vadd.f32 %v535, %v603
        %v605 = vpop.f32.mrb[0].mxu0
        %606 = vdwg.mxu0
        %v607 = vand.u32 2147483647, %v604
        %608 = vst.msk [vmem:[%s331] sm:$0xff] %vm344, %v607
        %s609 = sand.u32 %s189, 1
        %s610 = scalar_lea.sflag [#allocation4], %s609
        %s611 = sand.u32 %s189, 1
        %s612 = smul.addr %s611, 8
        %s613 = scalar_lea.vmem [#allocation5], %s612
        %s614 = sand.u32 %s215, 1
        %s615 = scalar_lea.sflag [#allocation7], %s614
        %s616 = sand.u32 %s215, 1
        %s617 = smul.addr %s616, 8
        %s618 = scalar_lea.vmem [#allocation6], %s617
        // Predicated region
        $region53: #{tpu_custom_call.1} parent=47 // pred_check
          %p619 = pneg %p199
        $region54: #{tpu_custom_call.1} parent=47 // pred_check_branch
          %621 = sbr.rel (%p619) target = $region56
        $region55: #{tpu_custom_call.1} parent=47 // pred_region
          %s623 = ssub.s32 128, 128
          %624 = vsyncadd %s610, %s623
          %s625 = smul.addr %s29, 128
          %s626 = scalar_lea.hbm %s7, %s625
          %s628 = sshll.u32 %s613, 4
          %s629 = int_to_ptr.vmem [resolvable:$true] %s628
          %631 = dma.vmem_to_hbm [thread:$0]  %s629, 128, %s626, %s610
        $region56: #{tpu_custom_call.1} parent=47 // pred_fallthru
          _
        // Predicated region
        $region57: #{tpu_custom_call.1} parent=47 // pred_check
          %p632 = pneg %p225
        $region58: #{tpu_custom_call.1} parent=47 // pred_check_branch
          %634 = sbr.rel (%p632) target = $region60
        $region59: #{tpu_custom_call.1} parent=47 // pred_region
          %s636 = ssub.s32 128, 128
          %637 = vsyncadd %s615, %s636
          %s638 = smul.addr %s29, 128
          %s639 = scalar_lea.hbm %s8, %s638
          %s641 = sshll.u32 %s618, 4
          %s642 = int_to_ptr.vmem [resolvable:$true] %s641
          %644 = dma.vmem_to_hbm [thread:$0]  %s642, 128, %s639, %s615
        $region60: #{tpu_custom_call.1} parent=47 // pred_fallthru
          _
      $region48: #{tpu_custom_call.1} parent=5 // pred_fallthru
        _
      %p645 = scmp.le.s32.totalorder 2, %s24
      // Predicated region
      $region61: #{tpu_custom_call.1} parent=5 // pred_check
        %p646 = pneg %p645
      $region62: #{tpu_custom_call.1} parent=5 // pred_check_branch
        %648 = sbr.rel (%p646) target = $region64
      $region63: #{tpu_custom_call.1} parent=5 // pred_region
        %s649 = ssub.s32 %s24, 2
        // Predicated region
        $region65: #{tpu_custom_call.1} parent=63 // pred_check
          %p650 = pneg %p205
        $region66: #{tpu_custom_call.1} parent=63 // pred_check_branch
          %652 = sbr.rel (%p650) target = $region68
        $region67: #{tpu_custom_call.1} parent=63 // pred_region
          %s653 = sand.u32 %s190, 1
          %s654 = scalar_lea.sflag [#allocation4], %s653
          %s655 = sand.u32 %s190, 1
          %s656 = smul.addr %s655, 8
          %s657 = scalar_lea.vmem [#allocation5], %s656
          %658 = dma.done %s654, 128
        $region68: #{tpu_custom_call.1} parent=63 // pred_fallthru
          _
        // Predicated region
        $region69: #{tpu_custom_call.1} parent=63 // pred_check
          %p659 = pneg %p231
        $region70: #{tpu_custom_call.1} parent=63 // pred_check_branch
          %661 = sbr.rel (%p659) target = $region72
        $region71: #{tpu_custom_call.1} parent=63 // pred_region
          %s662 = sand.u32 %s216, 1
          %s663 = scalar_lea.sflag [#allocation7], %s662
          %s664 = sand.u32 %s216, 1
          %s665 = smul.addr %s664, 8
          %s666 = scalar_lea.vmem [#allocation6], %s665
          %667 = dma.done %s663, 128
        $region72: #{tpu_custom_call.1} parent=63 // pred_fallthru
          _
      $region64: #{tpu_custom_call.1} parent=5 // pred_fallthru
        _
    $region6: #{tpu_custom_call.1} parent=1 // loop_footer
      %s28 = sadd.s32 1, %s24
    $region7: #{tpu_custom_call.1} parent=1 // loop_footer_branch
      %23 = sbr.rel target = $region3
    $region8: #{tpu_custom_call.1} parent=1 // loop_exit
      _
    %668 = vsyncpa [#allocation3], 1
    %s669 = scalar_lea.sflag [#allocation3], 1
    %670 = vsyncpa %s669, 1
    %671 = vsyncpa [#allocation4], 1
    %s672 = scalar_lea.sflag [#allocation4], 1
    %673 = vsyncpa %s672, 1
    %674 = vsyncpa [#allocation7], 1
    %s675 = scalar_lea.sflag [#allocation7], 1
    %676 = vsyncpa %s675, 1

</llo_original>
